<compile_context>
chip_gen: v5e
topology: v5e:2x2
jax: 0.10.0
libtpu: 0.0.40
codegen_flags: <defaults>
</compile_context>

<pallas_src>
import functools

import jax
import jax.numpy as jnp
from jax import lax
from jax.experimental import pallas as pl
from jax.experimental.pallas import tpu as pltpu

_LANE = 128


def _device_kind():
    try:
        return jax.devices()[0].device_kind.lower()
    except Exception:
        return ""


_KIND = _device_kind()
_IS_V7X = "v7" in _KIND
_IS_V5 = "v5" in _KIND
# bf16 epilogue on v6e/v7x (bf16-capable VPU); f32 on v5e.
_EPILOGUE_DTYPE = jnp.float32 if _IS_V5 else jnp.bfloat16


def _critic_kernel(x_ref, w1_ref, b1_ref, w2_ref, b2_ref, w3_ref, b3_ref,
                   out_ref, *, out_dim, epilogue_dtype):
    # x_ref: (tb, input_dim) f32, batch-major straight from HBM.
    x = x_ref[...].astype(jnp.bfloat16)

    # Layer 1: contract the feature axes of W1 (128, in) and x (tb, in) so the
    # result is already feature-major (128, tb); f32 accumulation on the MXU.
    h1 = lax.dot_general(w1_ref[...], x, (((1,), (1,)), ((), ())),
                         preferred_element_type=jnp.float32)
    h1 = jnp.maximum(h1.astype(epilogue_dtype) + b1_ref[...], 0)
    h1 = h1.astype(jnp.bfloat16)

    # Layer 2: (64, 128) @ (128, tb) -> (64, tb).
    h2 = jnp.dot(w2_ref[...], h1, preferred_element_type=jnp.float32)
    h2 = jnp.maximum(h2.astype(epilogue_dtype) + b2_ref[...], 0)

    if out_dim == 1:
        # N=1 matmul would waste an MXU issue: VPU multiply + XLU sublane
        # reduce instead.  w3_ref is (64, 1) f32, so product/accum are f32.
        y = jnp.sum(h2 * w3_ref[...], axis=0, keepdims=True) + b3_ref[...]
    else:
        y = lax.dot_general(w3_ref[...].astype(jnp.bfloat16),
                            h2.astype(jnp.bfloat16),
                            (((0,), (0,)), ((), ())),
                            preferred_element_type=jnp.float32) + b3_ref[...]

    out_ref[...] = y.astype(out_ref.dtype)   # (out_dim, tb): lane-dense store


def prepare_critic_params(params):
    """One-time preprocessing of PyTorch-layout parameters (hoisted out of the
    per-call path): bf16 MXU operands, column-vector biases, transposed W3."""
    w1, b1 = params["w1"], params["b1"]
    w2, b2 = params["w2"], params["b2"]
    w3, b3 = params["w3"], params["b3"]
    h1_dim, h2_dim, out_dim = w1.shape[0], w2.shape[0], w3.shape[0]
    return {
        "w1": w1.astype(jnp.bfloat16),                         # (128, in)
        "b1": b1.reshape(h1_dim, 1).astype(_EPILOGUE_DTYPE),   # (128, 1)
        "w2": w2.astype(jnp.bfloat16),                         # (64, 128)
        "b2": b2.reshape(h2_dim, 1).astype(_EPILOGUE_DTYPE),   # (64, 1)
        "w3t": w3.T.astype(jnp.float32),                       # (64, out)
        "b3": b3.reshape(out_dim, 1).astype(jnp.float32),      # (out, 1)
    }


@functools.partial(jax.jit, static_argnames=("batch_tile",))
def critic_forward(x, prepared, *, batch_tile=4096):
    """Run the critic MLP.

    Args:
      x: float32 [batch, input_dim] (batch-major, no host-side relayout).
      prepared: output of prepare_critic_params().
    Returns:
      float32 [batch, output_dim].
    """
    x = x.astype(jnp.float32)
    batch, input_dim = x.shape
    w1, b1 = prepared["w1"], prepared["b1"]
    w2, b2 = prepared["w2"], prepared["b2"]
    w3t, b3 = prepared["w3t"], prepared["b3"]
    h1_dim, h2_dim = w1.shape[0], w2.shape[0]
    out_dim = w3t.shape[1]

    # Batch tile (lane axis of the output): multiple of 128, as large as
    # requested (big tiles amortize the ~0.35 us/step pipeline overhead and
    # make the x DMA HBM-roofline sized), never larger than the 128-rounded
    # batch.  No padding: Pallas masks the ragged last block.
    padded_min = pl.cdiv(batch, _LANE) * _LANE
    tb = max(_LANE, (min(batch_tile, padded_min) // _LANE) * _LANE)
    num_tiles = pl.cdiv(batch, tb)
    # v7x only: the ("parallel",) grid is sharded across 2 TensorCores -- aim
    # for an even step count so both cores get equal work.
    if _IS_V7X and num_tiles % 2 == 1 and tb > _LANE:
        cand = pl.cdiv(pl.cdiv(batch, num_tiles + 1), _LANE) * _LANE
        if cand >= _LANE and pl.cdiv(batch, cand) % 2 == 0:
            tb = cand
            num_tiles = pl.cdiv(batch, tb)

    kernel = functools.partial(_critic_kernel, out_dim=out_dim,
                               epilogue_dtype=_EPILOGUE_DTYPE)

    out = pl.pallas_call(
        kernel,
        out_shape=jax.ShapeDtypeStruct((out_dim, batch), jnp.float32),
        grid_spec=pltpu.PrefetchScalarGridSpec(
            num_scalar_prefetch=0,
            grid=(num_tiles,),
            in_specs=[
                pl.BlockSpec((tb, input_dim), lambda i: (i, 0)),      # x tile
                pl.BlockSpec((h1_dim, input_dim), lambda i: (0, 0)),  # W1
                pl.BlockSpec((h1_dim, 1), lambda i: (0, 0)),          # b1
                pl.BlockSpec((h2_dim, h1_dim), lambda i: (0, 0)),     # W2
                pl.BlockSpec((h2_dim, 1), lambda i: (0, 0)),          # b2
                pl.BlockSpec((h2_dim, out_dim), lambda i: (0, 0)),    # W3^T
                pl.BlockSpec((out_dim, 1), lambda i: (0, 0)),         # b3
            ],
            out_specs=pl.BlockSpec((out_dim, tb), lambda i: (0, i)),
        ),
        compiler_params=pltpu.CompilerParams(
            dimension_semantics=("parallel",)),
    )(x, w1, b1, w2, b2, w3t, b3)

    # Back to batch-major.  No padded columns to slice: out is (out_dim, batch).
    return out.T


def init_critic_params(key, input_dim, output_dim):
    """Deterministic synthetic init matching PyTorch nn.Linear layouts/ranges."""
    k1, k2, k3, k4, k5, k6 = jax.random.split(key, 6)

    def uniform(k, shape, fan_in):
        bound = 1.0 / jnp.sqrt(fan_in)
        return jax.random.uniform(k, shape, jnp.float32, -bound, bound)

    return {
        "w1": uniform(k1, (128, input_dim), input_dim),
        "b1": uniform(k2, (128,), input_dim),
        "w2": uniform(k3, (64, 128), 128),
        "b2": uniform(k4, (64,), 128),
        "w3": uniform(k5, (output_dim, 64), 64),
        "b3": uniform(k6, (output_dim,), 64),
    }


def _reference_forward(x, p):
    h1 = jnp.maximum(x @ p["w1"].T + p["b1"], 0.0)
    h2 = jnp.maximum(h1 @ p["w2"].T + p["b2"], 0.0)
    return h2 @ p["w3"].T + p["b3"]


if __name__ == "__main__":
    key = jax.random.PRNGKey(0)
    k_param, k_x1, k_x2 = jax.random.split(key, 3)

    input_dim = 16    # observation-space size
    output_dim = 1    # scalar state value
    params = init_critic_params(k_param, input_dim, output_dim)
    prepared = prepare_critic_params(params)   # one-time, hoisted out of forward

    # Small batch: single (masked, ragged) tile.
    x_small = jax.random.normal(k_x1, (8, input_dim), jnp.float32)
    y_small = jax.block_until_ready(critic_forward(x_small, prepared))
    assert y_small.shape == (8, output_dim)
    assert bool(jnp.allclose(y_small, _reference_forward(x_small, params),
                             atol=5e-2, rtol=5e-2)), "small-batch mismatch"

    # Non-multiple batch with the default (large) tile.
    x_big = jax.random.normal(k_x2, (300, input_dim), jnp.float32)
    y_big = jax.block_until_ready(critic_forward(x_big, prepared))
    assert y_big.shape == (300, output_dim)
    assert bool(jnp.allclose(y_big, _reference_forward(x_big, params),
                             atol=5e-2, rtol=5e-2)), "default-tile mismatch"

    # Forced small tile: multi-step parallel grid + ragged masked last block.
    y_big2 = jax.block_until_ready(
        critic_forward(x_big, prepared, batch_tile=128))
    assert y_big2.shape == (300, output_dim)
    assert bool(jnp.allclose(y_big2, _reference_forward(x_big, params),
                             atol=5e-2, rtol=5e-2)), "multi-tile mismatch"

    print("KERNEL_OK")
</pallas_src>

<mosaic_0001>
module attributes {stable_mosaic.version = 11 : i64} {
  func.func @_critic_kernel(%arg0: i32, %arg1: memref<128x16xf32, #tpu.memory_space<vmem>>, %arg2: memref<128x16xbf16, #tpu.memory_space<vmem>>, %arg3: memref<128x1xbf16, #tpu.memory_space<vmem>>, %arg4: memref<64x128xbf16, #tpu.memory_space<vmem>>, %arg5: memref<64x1xbf16, #tpu.memory_space<vmem>>, %arg6: memref<64x1xf32, #tpu.memory_space<vmem>>, %arg7: memref<1x1xf32, #tpu.memory_space<vmem>>, %arg8: memref<1x128xf32, #tpu.memory_space<vmem>>) attributes {dimension_semantics = [#tpu.dimension_semantics<parallel>], iteration_bounds = array<i64: 1>, scalar_prefetch = 0 : i64, scratch_operands = 0 : i64, tpu.core_type = #tpu.core_type<tc>, window_params = [{transform_indices = @transform_0, window_bounds = array<i64: 128, 16>}, {pipeline_mode = #tpu.pipeline_mode<synchronous>, transform_indices = @transform_1, window_bounds = array<i64: 128, 16>}, {pipeline_mode = #tpu.pipeline_mode<synchronous>, transform_indices = @transform_2, window_bounds = array<i64: 128, 1>}, {pipeline_mode = #tpu.pipeline_mode<synchronous>, transform_indices = @transform_3, window_bounds = array<i64: 64, 128>}, {pipeline_mode = #tpu.pipeline_mode<synchronous>, transform_indices = @transform_4, window_bounds = array<i64: 64, 1>}, {pipeline_mode = #tpu.pipeline_mode<synchronous>, transform_indices = @transform_5, window_bounds = array<i64: 64, 1>}, {pipeline_mode = #tpu.pipeline_mode<synchronous>, transform_indices = @transform_6, window_bounds = array<i64: 1, 1>}, {transform_indices = @transform_7, window_bounds = array<i64: 1, 128>}]} {
    %c0 = arith.constant 0 : index
    %c0_0 = arith.constant 0 : index
    %0 = vector.load %arg1[%c0, %c0_0] : memref<128x16xf32, #tpu.memory_space<vmem>>, vector<128x16xf32>
    %1 = arith.truncf %0 : vector<128x16xf32> to vector<128x16xbf16>
    %c0_1 = arith.constant 0 : index
    %c0_2 = arith.constant 0 : index
    %2 = vector.load %arg2[%c0_1, %c0_2] : memref<128x16xbf16, #tpu.memory_space<vmem>>, vector<128x16xbf16>
    %cst = arith.constant dense<0.000000e+00> : vector<128x128xf32>
    %3 = tpu.matmul %2, %1, %cst {dimension_numbers = #tpu.dot_dimension_numbers<[1], [1], [0], [0], [0, 0, 1, 0], [], []>} : vector<128x16xbf16>, vector<128x16xbf16>, vector<128x128xf32> -> vector<128x128xf32>
    %4 = arith.truncf %3 : vector<128x128xf32> to vector<128x128xbf16>
    %c0_3 = arith.constant 0 : index
    %c0_4 = arith.constant 0 : index
    %5 = vector.load %arg3[%c0_3, %c0_4] : memref<128x1xbf16, #tpu.memory_space<vmem>>, vector<128x1xbf16>
    %6 = vector.broadcast %5 : vector<128x1xbf16> to vector<128x128xbf16>
    %7 = arith.addf %4, %6 : vector<128x128xbf16>
    %cst_5 = arith.constant 0.000000e+00 : bf16
    %8 = vector.broadcast %cst_5 : bf16 to vector<128x128xbf16>
    %9 = arith.maximumf %7, %8 : vector<128x128xbf16>
    %c0_6 = arith.constant 0 : index
    %c0_7 = arith.constant 0 : index
    %10 = vector.load %arg4[%c0_6, %c0_7] : memref<64x128xbf16, #tpu.memory_space<vmem>>, vector<64x128xbf16>
    %cst_8 = arith.constant dense<0.000000e+00> : vector<64x128xf32>
    %11 = tpu.matmul %10, %9, %cst_8 {dimension_numbers = #tpu.dot_dimension_numbers<[1], [0], [0], [1], [0, 0, 1, 1], [], []>} : vector<64x128xbf16>, vector<128x128xbf16>, vector<64x128xf32> -> vector<64x128xf32>
    %12 = arith.truncf %11 : vector<64x128xf32> to vector<64x128xbf16>
    %c0_9 = arith.constant 0 : index
    %c0_10 = arith.constant 0 : index
    %13 = vector.load %arg5[%c0_9, %c0_10] : memref<64x1xbf16, #tpu.memory_space<vmem>>, vector<64x1xbf16>
    %14 = vector.broadcast %13 : vector<64x1xbf16> to vector<64x128xbf16>
    %15 = arith.addf %12, %14 : vector<64x128xbf16>
    %cst_11 = arith.constant 0.000000e+00 : bf16
    %16 = vector.broadcast %cst_11 : bf16 to vector<64x128xbf16>
    %17 = arith.maximumf %15, %16 : vector<64x128xbf16>
    %c0_12 = arith.constant 0 : index
    %c0_13 = arith.constant 0 : index
    %18 = vector.load %arg6[%c0_12, %c0_13] : memref<64x1xf32, #tpu.memory_space<vmem>>, vector<64x1xf32>
    %19 = arith.extf %17 : vector<64x128xbf16> to vector<64x128xf32>
    %20 = vector.broadcast %18 : vector<64x1xf32> to vector<64x128xf32>
    %21 = arith.mulf %19, %20 : vector<64x128xf32>
    %cst_14 = arith.constant dense<0.000000e+00> : vector<128xf32>
    %22 = vector.multi_reduction <add>, %21, %cst_14 [0] : vector<64x128xf32> to vector<128xf32>
    %23 = vector.shape_cast %22 : vector<128xf32> to vector<1x128xf32>
    %c0_15 = arith.constant 0 : index
    %c0_16 = arith.constant 0 : index
    %24 = vector.load %arg7[%c0_15, %c0_16] : memref<1x1xf32, #tpu.memory_space<vmem>>, vector<1x1xf32>
    %25 = vector.broadcast %24 : vector<1x1xf32> to vector<1x128xf32>
    %26 = arith.addf %23, %25 : vector<1x128xf32>
    %c0_17 = arith.constant 0 : index
    %c0_18 = arith.constant 0 : index
    %27 = vector.load %arg8[%c0_17, %c0_18] : memref<1x128xf32, #tpu.memory_space<vmem>>, vector<1x128xf32>
    tpu.vector_store %arg8[%c0_17, %c0_18], %26 {strides = array<i32>} : memref<1x128xf32, #tpu.memory_space<vmem>>, vector<1x128xf32>,
    return
  }
  func.func @transform_0(%arg0: i32) -> (i32, i32) {
    %c0_i32 = arith.constant 0 : i32
    %c0_i32_0 = arith.constant 0 : i32
    return %arg0, %c0_i32 : i32, i32
  }
  func.func @transform_1(%arg0: i32) -> (i32, i32) {
    %c0_i32 = arith.constant 0 : i32
    %c0_i32_0 = arith.constant 0 : i32
    %c0_i32_1 = arith.constant 0 : i32
    return %c0_i32, %c0_i32_0 : i32, i32
  }
  func.func @transform_2(%arg0: i32) -> (i32, i32) {
    %c0_i32 = arith.constant 0 : i32
    %c0_i32_0 = arith.constant 0 : i32
    %c0_i32_1 = arith.constant 0 : i32
    return %c0_i32, %c0_i32_0 : i32, i32
  }
  func.func @transform_3(%arg0: i32) -> (i32, i32) {
    %c0_i32 = arith.constant 0 : i32
    %c0_i32_0 = arith.constant 0 : i32
    %c0_i32_1 = arith.constant 0 : i32
    return %c0_i32, %c0_i32_0 : i32, i32
  }
  func.func @transform_4(%arg0: i32) -> (i32, i32) {
    %c0_i32 = arith.constant 0 : i32
    %c0_i32_0 = arith.constant 0 : i32
    %c0_i32_1 = arith.constant 0 : i32
    return %c0_i32, %c0_i32_0 : i32, i32
  }
  func.func @transform_5(%arg0: i32) -> (i32, i32) {
    %c0_i32 = arith.constant 0 : i32
    %c0_i32_0 = arith.constant 0 : i32
    %c0_i32_1 = arith.constant 0 : i32
    return %c0_i32, %c0_i32_0 : i32, i32
  }
  func.func @transform_6(%arg0: i32) -> (i32, i32) {
    %c0_i32 = arith.constant 0 : i32
    %c0_i32_0 = arith.constant 0 : i32
    %c0_i32_1 = arith.constant 0 : i32
    return %c0_i32, %c0_i32_0 : i32, i32
  }
  func.func @transform_7(%arg0: i32) -> (i32, i32) {
    %c0_i32 = arith.constant 0 : i32
    %c0_i32_0 = arith.constant 0 : i32
    return %c0_i32, %arg0 : i32, i32
  }
}

</mosaic_0001>

<llo_original>
// kernel: critic_forward.1
$region0: #{critic_forward.1}
  #allocation0 [shape = 'u32[]', space=smem, size = 0x4, offset = 0x4, fixed_abs, tag = 'smem constant byte address 0x4 - core index']
  #allocation1 [shape = 'u32[72,128]{1,0:T(1,128)}', space=vmem, size = 0x9000, scoped, tag = 'internal scratch']
  #allocation2 [shape = 'f32[1,1]{1,0:T(1,128)S(1)}', space=vmem, size = 0x200, scoped, tag = 'scoped memory for critic_forward.1']
  %s0 = inlined_call_operand.vmem [shape: f32[8,16], index: 0, kind: input, shape index: {}]
  %s1 = inlined_call_operand.vmem [shape: bf16[128,16], index: 1, kind: input, shape index: {}]
  %s2 = inlined_call_operand.vmem [shape: bf16[128,1], index: 2, kind: input, shape index: {}]
  %s3 = inlined_call_operand.vmem [shape: bf16[64,128], index: 3, kind: input, shape index: {}]
  %s4 = inlined_call_operand.vmem [shape: bf16[64,1], index: 4, kind: input, shape index: {}]
  %s5 = inlined_call_operand.vmem [shape: f32[64,1], index: 5, kind: input, shape index: {}]
  %s6 = inlined_call_operand.<no memory space> [shape: f32[1,1], index: 6, kind: input, shape index: {}]
  %s7 = inlined_call_operand.hbm [shape: f32[1,8], index: 7, kind: output, shape index: {}]
  %s8 = sld [smem:[#allocation0]]
  $region38: #{critic_forward.1} parent=0
    _
  %s10 = ssub.s32 1, %s8
  %s11 = scalar_select 0, %s10, %s8
  %v12 = vstv %s6
  %13 = vst [vmem:[#allocation2] sm:$0x1] %v12
  $region1: #{critic_forward.1} parent=0
    #allocation3 [shape = 'u8[512]{0}', space=vmem, size = 0x400, scoped, tag = 'output window, operand 0, single buffered']
    #allocation4 [shape = 's32[1]{0}', space=sflag, size = 0x4, scoped, tag = 'scoped memory for critic_forward.1']
    %14 = vsyncpa [#allocation4], 0
    // Predicated region
    $region2: #{critic_forward.1} parent=1 // pred_check
      _
    $region3: #{critic_forward.1} parent=1 // pred_check_branch
      %16 = sbr.rel (0) target = $region5
    $region4: #{critic_forward.1} parent=1 // pred_region
      _
    $region5: #{critic_forward.1} parent=1 // pred_fallthru
      _
    // Predicated region
    $region6: #{critic_forward.1} parent=1 // pred_check
      _
    $region7: #{critic_forward.1} parent=1 // pred_check_branch
      %18 = sbr.rel (0) target = $region9
    $region8: #{critic_forward.1} parent=1 // pred_region
      _
    $region9: #{critic_forward.1} parent=1 // pred_fallthru
      _
    // Predicated region
    $region10: #{critic_forward.1} parent=1 // pred_check
      _
    $region11: #{critic_forward.1} parent=1 // pred_check_branch
      %20 = sbr.rel (0) target = $region13
    $region12: #{critic_forward.1} parent=1 // pred_region
      _
    $region13: #{critic_forward.1} parent=1 // pred_fallthru
      _
    // Predicated region
    $region14: #{critic_forward.1} parent=1 // pred_check
      _
    $region15: #{critic_forward.1} parent=1 // pred_check_branch
      %22 = sbr.rel (0) target = $region17
    $region16: #{critic_forward.1} parent=1 // pred_region
      _
    $region17: #{critic_forward.1} parent=1 // pred_fallthru
      _
    // Predicated region
    $region18: #{critic_forward.1} parent=1 // pred_check
      _
    $region19: #{critic_forward.1} parent=1 // pred_check_branch
      %24 = sbr.rel (0) target = $region21
    $region20: #{critic_forward.1} parent=1 // pred_region
      _
    $region21: #{critic_forward.1} parent=1 // pred_fallthru
      _
    // Predicated region
    $region22: #{critic_forward.1} parent=1 // pred_check
      _
    $region23: #{critic_forward.1} parent=1 // pred_check_branch
      %26 = sbr.rel (0) target = $region25
    $region24: #{critic_forward.1} parent=1 // pred_region
      _
    $region25: #{critic_forward.1} parent=1 // pred_fallthru
      _
    // Predicated region
    $region26: #{critic_forward.1} parent=1 // pred_check
      _
    $region27: #{critic_forward.1} parent=1 // pred_check_branch
      %28 = sbr.rel (0) target = $region29
    $region28: #{critic_forward.1} parent=1 // pred_region
      _
    $region29: #{critic_forward.1} parent=1 // pred_fallthru
      _
    %v29 = vld [vmem:[%s0] sm:$0xff]
    %v30 = vld [vmem:[%s0 + $0x8] sm:$0xff]
    %v31 = vld [vmem:[%s0 + $0x10] sm:$0xff]
    %v32 = vld [vmem:[%s0 + $0x18] sm:$0xff]
    %v33 = vld [vmem:[%s0 + $0x20] sm:$0xff]
    %v34 = vld [vmem:[%s0 + $0x28] sm:$0xff]
    %v35 = vld [vmem:[%s0 + $0x30] sm:$0xff]
    %v36 = vld [vmem:[%s0 + $0x38] sm:$0xff]
    %v37 = vld [vmem:[%s0 + $0x40] sm:$0xff]
    %v38 = vld [vmem:[%s0 + $0x48] sm:$0xff]
    %v39 = vld [vmem:[%s0 + $0x50] sm:$0xff]
    %v40 = vld [vmem:[%s0 + $0x58] sm:$0xff]
    %v41 = vld [vmem:[%s0 + $0x60] sm:$0xff]
    %v42 = vld [vmem:[%s0 + $0x68] sm:$0xff]
    %v43 = vld [vmem:[%s0 + $0x70] sm:$0xff]
    %v44 = vld [vmem:[%s0 + $0x78] sm:$0xff]
    %v45 = vpack.c.bf16 %v30, %v29
    %v46 = vpack.c.bf16 %v32, %v31
    %v47 = vpack.c.bf16 %v34, %v33
    %v48 = vpack.c.bf16 %v36, %v35
    %v49 = vpack.c.bf16 %v38, %v37
    %v50 = vpack.c.bf16 %v40, %v39
    %v51 = vpack.c.bf16 %v42, %v41
    %v52 = vpack.c.bf16 %v44, %v43
    %v53 = vld [vmem:[%s1] sm:$0xf]
    %v54 = vld [vmem:[%s1 + $0x4] sm:$0xf]
    %v55 = vld [vmem:[%s1 + $0x8] sm:$0xf]
    %v56 = vld [vmem:[%s1 + $0xc] sm:$0xf]
    %v57 = vld [vmem:[%s1 + $0x10] sm:$0xf]
    %v58 = vld [vmem:[%s1 + $0x14] sm:$0xf]
    %v59 = vld [vmem:[%s1 + $0x18] sm:$0xf]
    %v60 = vld [vmem:[%s1 + $0x1c] sm:$0xf]
    %v61 = vld [vmem:[%s1 + $0x20] sm:$0xf]
    %v62 = vld [vmem:[%s1 + $0x24] sm:$0xf]
    %v63 = vld [vmem:[%s1 + $0x28] sm:$0xf]
    %v64 = vld [vmem:[%s1 + $0x2c] sm:$0xf]
    %v65 = vld [vmem:[%s1 + $0x30] sm:$0xf]
    %v66 = vld [vmem:[%s1 + $0x34] sm:$0xf]
    %v67 = vld [vmem:[%s1 + $0x38] sm:$0xf]
    %v68 = vld [vmem:[%s1 + $0x3c] sm:$0xf]
    %v85 = vunpack.c.l.b16 %v53
    %v86 = vunpack.c.l.b16 %v54
    %v87 = vunpack.c.l.b16 %v55
    %v88 = vunpack.c.l.b16 %v56
    %v89 = vunpack.c.l.b16 %v57
    %v90 = vunpack.c.l.b16 %v58
    %v91 = vunpack.c.l.b16 %v59
    %v92 = vunpack.c.l.b16 %v60
    %v93 = vunpack.c.l.b16 %v61
    %v94 = vunpack.c.l.b16 %v62
    %v95 = vunpack.c.l.b16 %v63
    %v96 = vunpack.c.l.b16 %v64
    %v97 = vunpack.c.l.b16 %v65
    %v98 = vunpack.c.l.b16 %v66
    %v99 = vunpack.c.l.b16 %v67
    %v100 = vunpack.c.l.b16 %v68
    %v101 = vpack.c.b16 %v86, %v85
    %v102 = vpack.c.b16 %v88, %v87
    %v103 = vpack.c.b16 %v90, %v89
    %v104 = vpack.c.b16 %v92, %v91
    %v105 = vpack.c.b16 %v94, %v93
    %v106 = vpack.c.b16 %v96, %v95
    %v107 = vpack.c.b16 %v98, %v97
    %v108 = vpack.c.b16 %v100, %v99
    %vm109 = vcmask 130048
    %v111 = vsel %vm109, %v101, 0
    %v114 = vsel %vm109, %v102, 0
    %v117 = vsel %vm109, %v103, 0
    %v120 = vsel %vm109, %v104, 0
    %v123 = vsel %vm109, %v105, 0
    %v126 = vsel %vm109, %v106, 0
    %v129 = vsel %vm109, %v107, 0
    %v132 = vsel %vm109, %v108, 0
    %v135 = vsel %vm109, %v45, 0
    %v138 = vsel %vm109, %v46, 0
    %v141 = vsel %vm109, %v47, 0
    %v144 = vsel %vm109, %v48, 0
    %v147 = vsel %vm109, %v49, 0
    %v150 = vsel %vm109, %v50, 0
    %v153 = vsel %vm109, %v51, 0
    %v156 = vsel %vm109, %v52, 0
    %158 = vmatpush.bf16.xpose.msra.mxu0 %v156
    %159 = vmatpush.bf16.xpose.msra.mxu0 %v153
    %160 = vmatpush.bf16.xpose.msra.mxu0 %v150
    %161 = vmatpush.bf16.xpose.msra.mxu0 %v147
    %162 = vmatpush.bf16.xpose.msra.mxu0 %v144
    %163 = vmatpush.bf16.xpose.msra.mxu0 %v141
    %164 = vmatpush.bf16.xpose.msra.mxu0 %v138
    %165 = vmatpush.bf16.xpose.msra.mxu0 %v135
    %166 = vmatmul.bf16.gmra.mxu0 %v111
    %v167 = vpop.f32.mrf.mxu0
    %v168 = vadd.f32 0.0, %v167
    %v169 = vpop.f32.mrf.mxu0
    %v170 = vadd.f32 0.0, %v169
    %171 = vmatmul.bf16.gmra.mxu0 %v114
    %v172 = vpop.f32.mrf.mxu0
    %v173 = vadd.f32 0.0, %v172
    %v174 = vpop.f32.mrf.mxu0
    %v175 = vadd.f32 0.0, %v174
    %176 = vmatmul.bf16.gmra.mxu0 %v117
    %v177 = vpop.f32.mrf.mxu0
    %v178 = vadd.f32 0.0, %v177
    %v179 = vpop.f32.mrf.mxu0
    %v180 = vadd.f32 0.0, %v179
    %181 = vmatmul.bf16.gmra.mxu0 %v120
    %v182 = vpop.f32.mrf.mxu0
    %v183 = vadd.f32 0.0, %v182
    %v184 = vpop.f32.mrf.mxu0
    %v185 = vadd.f32 0.0, %v184
    %186 = vmatmul.bf16.gmra.mxu0 %v123
    %v187 = vpop.f32.mrf.mxu0
    %v188 = vadd.f32 0.0, %v187
    %v189 = vpop.f32.mrf.mxu0
    %v190 = vadd.f32 0.0, %v189
    %191 = vmatmul.bf16.gmra.mxu0 %v126
    %v192 = vpop.f32.mrf.mxu0
    %v193 = vadd.f32 0.0, %v192
    %v194 = vpop.f32.mrf.mxu0
    %v195 = vadd.f32 0.0, %v194
    %196 = vmatmul.bf16.gmra.mxu0 %v129
    %v197 = vpop.f32.mrf.mxu0
    %v198 = vadd.f32 0.0, %v197
    %v199 = vpop.f32.mrf.mxu0
    %v200 = vadd.f32 0.0, %v199
    %201 = vmatmul.bf16.gmra.mxu0 %v132
    %v202 = vpop.f32.mrf.mxu0
    %v203 = vadd.f32 0.0, %v202
    %v204 = vpop.f32.mrf.mxu0
    %v205 = vadd.f32 0.0, %v204
    %206 = vdwg.mxu0
    %v207 = vpack.c.bf16 %v168, %v168
    %v208 = vpack.c.bf16 %v170, %v170
    %v209 = vpack.c.bf16 %v173, %v173
    %v210 = vpack.c.bf16 %v175, %v175
    %v211 = vpack.c.bf16 %v178, %v178
    %v212 = vpack.c.bf16 %v180, %v180
    %v213 = vpack.c.bf16 %v183, %v183
    %v214 = vpack.c.bf16 %v185, %v185
    %v215 = vpack.c.bf16 %v188, %v188
    %v216 = vpack.c.bf16 %v190, %v190
    %v217 = vpack.c.bf16 %v193, %v193
    %v218 = vpack.c.bf16 %v195, %v195
    %v219 = vpack.c.bf16 %v198, %v198
    %v220 = vpack.c.bf16 %v200, %v200
    %v221 = vpack.c.bf16 %v203, %v203
    %v222 = vpack.c.bf16 %v205, %v205
    %v223 = vld [vmem:[%s2] sm:$0xf]
    %v224 = vld [vmem:[%s2 + $0x4] sm:$0xf]
    %v225 = vld [vmem:[%s2 + $0x8] sm:$0xf]
    %v226 = vld [vmem:[%s2 + $0xc] sm:$0xf]
    %v227 = vld [vmem:[%s2 + $0x10] sm:$0xf]
    %v228 = vld [vmem:[%s2 + $0x14] sm:$0xf]
    %v229 = vld [vmem:[%s2 + $0x18] sm:$0xf]
    %v230 = vld [vmem:[%s2 + $0x1c] sm:$0xf]
    %v231 = vld [vmem:[%s2 + $0x20] sm:$0xf]
    %v232 = vld [vmem:[%s2 + $0x24] sm:$0xf]
    %v233 = vld [vmem:[%s2 + $0x28] sm:$0xf]
    %v234 = vld [vmem:[%s2 + $0x2c] sm:$0xf]
    %v235 = vld [vmem:[%s2 + $0x30] sm:$0xf]
    %v236 = vld [vmem:[%s2 + $0x34] sm:$0xf]
    %v237 = vld [vmem:[%s2 + $0x38] sm:$0xf]
    %v238 = vld [vmem:[%s2 + $0x3c] sm:$0xf]
    %240 = vset.pattern.permute.xlu0 0
    %241 = vperm.xlu0 %240, %v223
    %v242 = vpop.permute.xlu0 %241
    %v245 = vunpack.c.l.s4 839922192
    %v246 = vunpack.c.0.s8 %v245
    %v247 = vperm.slane %v242, %v246
    %249 = vset.pattern.permute.xlu0 0
    %250 = vperm.xlu0 %249, %v224
    %v251 = vpop.permute.xlu0 %250
    %v254 = vunpack.c.l.s4 839922192
    %v255 = vunpack.c.0.s8 %v254
    %v256 = vperm.slane %v251, %v255
    %258 = vset.pattern.permute.xlu0 0
    %259 = vperm.xlu0 %258, %v225
    %v260 = vpop.permute.xlu0 %259
    %v263 = vunpack.c.l.s4 839922192
    %v264 = vunpack.c.0.s8 %v263
    %v265 = vperm.slane %v260, %v264
    %267 = vset.pattern.permute.xlu0 0
    %268 = vperm.xlu0 %267, %v226
    %v269 = vpop.permute.xlu0 %268
    %v272 = vunpack.c.l.s4 839922192
    %v273 = vunpack.c.0.s8 %v272
    %v274 = vperm.slane %v269, %v273
    %276 = vset.pattern.permute.xlu0 0
    %277 = vperm.xlu0 %276, %v227
    %v278 = vpop.permute.xlu0 %277
    %v281 = vunpack.c.l.s4 839922192
    %v282 = vunpack.c.0.s8 %v281
    %v283 = vperm.slane %v278, %v282
    %285 = vset.pattern.permute.xlu0 0
    %286 = vperm.xlu0 %285, %v228
    %v287 = vpop.permute.xlu0 %286
    %v290 = vunpack.c.l.s4 839922192
    %v291 = vunpack.c.0.s8 %v290
    %v292 = vperm.slane %v287, %v291
    %294 = vset.pattern.permute.xlu0 0
    %295 = vperm.xlu0 %294, %v229
    %v296 = vpop.permute.xlu0 %295
    %v299 = vunpack.c.l.s4 839922192
    %v300 = vunpack.c.0.s8 %v299
    %v301 = vperm.slane %v296, %v300
    %303 = vset.pattern.permute.xlu0 0
    %304 = vperm.xlu0 %303, %v230
    %v305 = vpop.permute.xlu0 %304
    %v308 = vunpack.c.l.s4 839922192
    %v309 = vunpack.c.0.s8 %v308
    %v310 = vperm.slane %v305, %v309
    %312 = vset.pattern.permute.xlu0 0
    %313 = vperm.xlu0 %312, %v231
    %v314 = vpop.permute.xlu0 %313
    %v317 = vunpack.c.l.s4 839922192
    %v318 = vunpack.c.0.s8 %v317
    %v319 = vperm.slane %v314, %v318
    %321 = vset.pattern.permute.xlu0 0
    %322 = vperm.xlu0 %321, %v232
    %v323 = vpop.permute.xlu0 %322
    %v326 = vunpack.c.l.s4 839922192
    %v327 = vunpack.c.0.s8 %v326
    %v328 = vperm.slane %v323, %v327
    %330 = vset.pattern.permute.xlu0 0
    %331 = vperm.xlu0 %330, %v233
    %v332 = vpop.permute.xlu0 %331
    %v335 = vunpack.c.l.s4 839922192
    %v336 = vunpack.c.0.s8 %v335
    %v337 = vperm.slane %v332, %v336
    %339 = vset.pattern.permute.xlu0 0
    %340 = vperm.xlu0 %339, %v234
    %v341 = vpop.permute.xlu0 %340
    %v344 = vunpack.c.l.s4 839922192
    %v345 = vunpack.c.0.s8 %v344
    %v346 = vperm.slane %v341, %v345
    %348 = vset.pattern.permute.xlu0 0
    %349 = vperm.xlu0 %348, %v235
    %v350 = vpop.permute.xlu0 %349
    %v353 = vunpack.c.l.s4 839922192
    %v354 = vunpack.c.0.s8 %v353
    %v355 = vperm.slane %v350, %v354
    %357 = vset.pattern.permute.xlu0 0
    %358 = vperm.xlu0 %357, %v236
    %v359 = vpop.permute.xlu0 %358
    %v362 = vunpack.c.l.s4 839922192
    %v363 = vunpack.c.0.s8 %v362
    %v364 = vperm.slane %v359, %v363
    %366 = vset.pattern.permute.xlu0 0
    %367 = vperm.xlu0 %366, %v237
    %v368 = vpop.permute.xlu0 %367
    %v371 = vunpack.c.l.s4 839922192
    %v372 = vunpack.c.0.s8 %v371
    %v373 = vperm.slane %v368, %v372
    %375 = vset.pattern.permute.xlu0 0
    %376 = vperm.xlu0 %375, %v238
    %v377 = vpop.permute.xlu0 %376
    %v380 = vunpack.c.l.s4 839922192
    %v381 = vunpack.c.0.s8 %v380
    %v382 = vperm.slane %v377, %v381
    %v383 = vunpack.c.l.bf16 %v207
    %v384 = vunpack.c.l.bf16 %v208
    %v385 = vunpack.c.l.bf16 %v209
    %v386 = vunpack.c.l.bf16 %v210
    %v387 = vunpack.c.l.bf16 %v211
    %v388 = vunpack.c.l.bf16 %v212
    %v389 = vunpack.c.l.bf16 %v213
    %v390 = vunpack.c.l.bf16 %v214
    %v391 = vunpack.c.l.bf16 %v215
    %v392 = vunpack.c.l.bf16 %v216
    %v393 = vunpack.c.l.bf16 %v217
    %v394 = vunpack.c.l.bf16 %v218
    %v395 = vunpack.c.l.bf16 %v219
    %v396 = vunpack.c.l.bf16 %v220
    %v397 = vunpack.c.l.bf16 %v221
    %v398 = vunpack.c.l.bf16 %v222
    %v399 = vunpack.c.l.bf16 %v247
    %v400 = vunpack.c.l.bf16 %v256
    %v401 = vunpack.c.l.bf16 %v265
    %v402 = vunpack.c.l.bf16 %v274
    %v403 = vunpack.c.l.bf16 %v283
    %v404 = vunpack.c.l.bf16 %v292
    %v405 = vunpack.c.l.bf16 %v301
    %v406 = vunpack.c.l.bf16 %v310
    %v407 = vunpack.c.l.bf16 %v319
    %v408 = vunpack.c.l.bf16 %v328
    %v409 = vunpack.c.l.bf16 %v337
    %v410 = vunpack.c.l.bf16 %v346
    %v411 = vunpack.c.l.bf16 %v355
    %v412 = vunpack.c.l.bf16 %v364
    %v413 = vunpack.c.l.bf16 %v373
    %v414 = vunpack.c.l.bf16 %v382
    %v415 = vadd.f32 %v383, %v399
    %v416 = vadd.f32 %v384, %v400
    %v417 = vadd.f32 %v385, %v401
    %v418 = vadd.f32 %v386, %v402
    %v419 = vadd.f32 %v387, %v403
    %v420 = vadd.f32 %v388, %v404
    %v421 = vadd.f32 %v389, %v405
    %v422 = vadd.f32 %v390, %v406
    %v423 = vadd.f32 %v391, %v407
    %v424 = vadd.f32 %v392, %v408
    %v425 = vadd.f32 %v393, %v409
    %v426 = vadd.f32 %v394, %v410
    %v427 = vadd.f32 %v395, %v411
    %v428 = vadd.f32 %v396, %v412
    %v429 = vadd.f32 %v397, %v413
    %v430 = vadd.f32 %v398, %v414
    %v431 = vpack.c.bf16 %v415, %v415
    %v432 = vpack.c.bf16 %v416, %v416
    %v433 = vpack.c.bf16 %v417, %v417
    %v434 = vpack.c.bf16 %v418, %v418
    %v435 = vpack.c.bf16 %v419, %v419
    %v436 = vpack.c.bf16 %v420, %v420
    %v437 = vpack.c.bf16 %v421, %v421
    %v438 = vpack.c.bf16 %v422, %v422
    %v439 = vpack.c.bf16 %v423, %v423
    %v440 = vpack.c.bf16 %v424, %v424
    %v441 = vpack.c.bf16 %v425, %v425
    %v442 = vpack.c.bf16 %v426, %v426
    %v443 = vpack.c.bf16 %v427, %v427
    %v444 = vpack.c.bf16 %v428, %v428
    %v445 = vpack.c.bf16 %v429, %v429
    %v446 = vpack.c.bf16 %v430, %v430
    %v447 = vunpack.c.l.bf16 %v431
    %v448 = vunpack.c.l.bf16 %v432
    %v449 = vunpack.c.l.bf16 %v433
    %v450 = vunpack.c.l.bf16 %v434
    %v451 = vunpack.c.l.bf16 %v435
    %v452 = vunpack.c.l.bf16 %v436
    %v453 = vunpack.c.l.bf16 %v437
    %v454 = vunpack.c.l.bf16 %v438
    %v455 = vunpack.c.l.bf16 %v439
    %v456 = vunpack.c.l.bf16 %v440
    %v457 = vunpack.c.l.bf16 %v441
    %v458 = vunpack.c.l.bf16 %v442
    %v459 = vunpack.c.l.bf16 %v443
    %v460 = vunpack.c.l.bf16 %v444
    %v461 = vunpack.c.l.bf16 %v445
    %v462 = vunpack.c.l.bf16 %v446
    %v463 = vmax.f32 %v447, 0.0
    %v464 = vmax.f32 %v448, 0.0
    %v465 = vmax.f32 %v449, 0.0
    %v466 = vmax.f32 %v450, 0.0
    %v467 = vmax.f32 %v451, 0.0
    %v468 = vmax.f32 %v452, 0.0
    %v469 = vmax.f32 %v453, 0.0
    %v470 = vmax.f32 %v454, 0.0
    %v471 = vmax.f32 %v455, 0.0
    %v472 = vmax.f32 %v456, 0.0
    %v473 = vmax.f32 %v457, 0.0
    %v474 = vmax.f32 %v458, 0.0
    %v475 = vmax.f32 %v459, 0.0
    %v476 = vmax.f32 %v460, 0.0
    %v477 = vmax.f32 %v461, 0.0
    %v478 = vmax.f32 %v462, 0.0
    %v479 = vpack.c.bf16 %v464, %v463
    %v480 = vpack.c.bf16 %v466, %v465
    %v481 = vpack.c.bf16 %v468, %v467
    %v482 = vpack.c.bf16 %v470, %v469
    %v483 = vpack.c.bf16 %v472, %v471
    %v484 = vpack.c.bf16 %v474, %v473
    %v485 = vpack.c.bf16 %v476, %v475
    %v486 = vpack.c.bf16 %v478, %v477
    %v487 = vld [vmem:[%s3] sm:$0xf]
    %v488 = vld [vmem:[%s3 + $0x4] sm:$0xf]
    %v489 = vld [vmem:[%s3 + $0x8] sm:$0xf]
    %v490 = vld [vmem:[%s3 + $0xc] sm:$0xf]
    %v491 = vld [vmem:[%s3 + $0x10] sm:$0xf]
    %v492 = vld [vmem:[%s3 + $0x14] sm:$0xf]
    %v493 = vld [vmem:[%s3 + $0x18] sm:$0xf]
    %v494 = vld [vmem:[%s3 + $0x1c] sm:$0xf]
    %v503 = vunpack.c.l.b16 %v487
    %v504 = vunpack.c.l.b16 %v488
    %v505 = vunpack.c.l.b16 %v489
    %v506 = vunpack.c.l.b16 %v490
    %v507 = vunpack.c.l.b16 %v491
    %v508 = vunpack.c.l.b16 %v492
    %v509 = vunpack.c.l.b16 %v493
    %v510 = vunpack.c.l.b16 %v494
    %v511 = vpack.c.b16 %v504, %v503
    %v512 = vpack.c.b16 %v506, %v505
    %v513 = vpack.c.b16 %v508, %v507
    %v514 = vpack.c.b16 %v510, %v509
    %519 = vmatpush.bf16.msra.mxu0 %v486
    %520 = vmatpush.bf16.msra.mxu0 %v485
    %521 = vmatpush.bf16.msra.mxu0 %v484
    %522 = vmatpush.bf16.msra.mxu0 %v483
    %523 = vmatpush.bf16.msra.mxu0 %v482
    %524 = vmatpush.bf16.msra.mxu0 %v481
    %525 = vmatpush.bf16.msra.mxu0 %v480
    %526 = vmatpush.bf16.msra.mxu0 %v479
    %527 = vmatmul.bf16.gmra.mxu0 %v511
    %v528 = vpop.f32.mrf.mxu0
    %v529 = vadd.f32 0.0, %v528
    %v530 = vpop.f32.mrf.mxu0
    %v531 = vadd.f32 0.0, %v530
    %532 = vmatmul.bf16.gmra.mxu0 %v512
    %v533 = vpop.f32.mrf.mxu0
    %v534 = vadd.f32 0.0, %v533
    %v535 = vpop.f32.mrf.mxu0
    %v536 = vadd.f32 0.0, %v535
    %537 = vmatmul.bf16.gmra.mxu0 %v513
    %v538 = vpop.f32.mrf.mxu0
    %v539 = vadd.f32 0.0, %v538
    %v540 = vpop.f32.mrf.mxu0
    %v541 = vadd.f32 0.0, %v540
    %542 = vmatmul.bf16.gmra.mxu0 %v514
    %v543 = vpop.f32.mrf.mxu0
    %v544 = vadd.f32 0.0, %v543
    %v545 = vpop.f32.mrf.mxu0
    %v546 = vadd.f32 0.0, %v545
    %547 = vdwg.mxu0
    %v548 = vpack.c.bf16 %v529, %v529
    %v549 = vpack.c.bf16 %v531, %v531
    %v550 = vpack.c.bf16 %v534, %v534
    %v551 = vpack.c.bf16 %v536, %v536
    %v552 = vpack.c.bf16 %v539, %v539
    %v553 = vpack.c.bf16 %v541, %v541
    %v554 = vpack.c.bf16 %v544, %v544
    %v555 = vpack.c.bf16 %v546, %v546
    %v556 = vld [vmem:[%s4] sm:$0xf]
    %v557 = vld [vmem:[%s4 + $0x4] sm:$0xf]
    %v558 = vld [vmem:[%s4 + $0x8] sm:$0xf]
    %v559 = vld [vmem:[%s4 + $0xc] sm:$0xf]
    %v560 = vld [vmem:[%s4 + $0x10] sm:$0xf]
    %v561 = vld [vmem:[%s4 + $0x14] sm:$0xf]
    %v562 = vld [vmem:[%s4 + $0x18] sm:$0xf]
    %v563 = vld [vmem:[%s4 + $0x1c] sm:$0xf]
    %565 = vset.pattern.permute.xlu0 0
    %566 = vperm.xlu0 %565, %v556
    %v567 = vpop.permute.xlu0 %566
    %v570 = vunpack.c.l.s4 839922192
    %v571 = vunpack.c.0.s8 %v570
    %v572 = vperm.slane %v567, %v571
    %574 = vset.pattern.permute.xlu0 0
    %575 = vperm.xlu0 %574, %v557
    %v576 = vpop.permute.xlu0 %575
    %v579 = vunpack.c.l.s4 839922192
    %v580 = vunpack.c.0.s8 %v579
    %v581 = vperm.slane %v576, %v580
    %583 = vset.pattern.permute.xlu0 0
    %584 = vperm.xlu0 %583, %v558
    %v585 = vpop.permute.xlu0 %584
    %v588 = vunpack.c.l.s4 839922192
    %v589 = vunpack.c.0.s8 %v588
    %v590 = vperm.slane %v585, %v589
    %592 = vset.pattern.permute.xlu0 0
    %593 = vperm.xlu0 %592, %v559
    %v594 = vpop.permute.xlu0 %593
    %v597 = vunpack.c.l.s4 839922192
    %v598 = vunpack.c.0.s8 %v597
    %v599 = vperm.slane %v594, %v598
    %601 = vset.pattern.permute.xlu0 0
    %602 = vperm.xlu0 %601, %v560
    %v603 = vpop.permute.xlu0 %602
    %v606 = vunpack.c.l.s4 839922192
    %v607 = vunpack.c.0.s8 %v606
    %v608 = vperm.slane %v603, %v607
    %610 = vset.pattern.permute.xlu0 0
    %611 = vperm.xlu0 %610, %v561
    %v612 = vpop.permute.xlu0 %611
    %v615 = vunpack.c.l.s4 839922192
    %v616 = vunpack.c.0.s8 %v615
    %v617 = vperm.slane %v612, %v616
    %619 = vset.pattern.permute.xlu0 0
    %620 = vperm.xlu0 %619, %v562
    %v621 = vpop.permute.xlu0 %620
    %v624 = vunpack.c.l.s4 839922192
    %v625 = vunpack.c.0.s8 %v624
    %v626 = vperm.slane %v621, %v625
    %628 = vset.pattern.permute.xlu0 0
    %629 = vperm.xlu0 %628, %v563
    %v630 = vpop.permute.xlu0 %629
    %v633 = vunpack.c.l.s4 839922192
    %v634 = vunpack.c.0.s8 %v633
    %v635 = vperm.slane %v630, %v634
    %v636 = vunpack.c.l.bf16 %v548
    %v637 = vunpack.c.l.bf16 %v549
    %v638 = vunpack.c.l.bf16 %v550
    %v639 = vunpack.c.l.bf16 %v551
    %v640 = vunpack.c.l.bf16 %v552
    %v641 = vunpack.c.l.bf16 %v553
    %v642 = vunpack.c.l.bf16 %v554
    %v643 = vunpack.c.l.bf16 %v555
    %v644 = vunpack.c.l.bf16 %v572
    %v645 = vunpack.c.l.bf16 %v581
    %v646 = vunpack.c.l.bf16 %v590
    %v647 = vunpack.c.l.bf16 %v599
    %v648 = vunpack.c.l.bf16 %v608
    %v649 = vunpack.c.l.bf16 %v617
    %v650 = vunpack.c.l.bf16 %v626
    %v651 = vunpack.c.l.bf16 %v635
    %v652 = vadd.f32 %v636, %v644
    %v653 = vadd.f32 %v637, %v645
    %v654 = vadd.f32 %v638, %v646
    %v655 = vadd.f32 %v639, %v647
    %v656 = vadd.f32 %v640, %v648
    %v657 = vadd.f32 %v641, %v649
    %v658 = vadd.f32 %v642, %v650
    %v659 = vadd.f32 %v643, %v651
    %v660 = vpack.c.bf16 %v652, %v652
    %v661 = vpack.c.bf16 %v653, %v653
    %v662 = vpack.c.bf16 %v654, %v654
    %v663 = vpack.c.bf16 %v655, %v655
    %v664 = vpack.c.bf16 %v656, %v656
    %v665 = vpack.c.bf16 %v657, %v657
    %v666 = vpack.c.bf16 %v658, %v658
    %v667 = vpack.c.bf16 %v659, %v659
    %v668 = vunpack.c.l.bf16 %v660
    %v669 = vunpack.c.l.bf16 %v661
    %v670 = vunpack.c.l.bf16 %v662
    %v671 = vunpack.c.l.bf16 %v663
    %v672 = vunpack.c.l.bf16 %v664
    %v673 = vunpack.c.l.bf16 %v665
    %v674 = vunpack.c.l.bf16 %v666
    %v675 = vunpack.c.l.bf16 %v667
    %v676 = vmax.f32 %v668, 0.0
    %v677 = vmax.f32 %v669, 0.0
    %v678 = vmax.f32 %v670, 0.0
    %v679 = vmax.f32 %v671, 0.0
    %v680 = vmax.f32 %v672, 0.0
    %v681 = vmax.f32 %v673, 0.0
    %v682 = vmax.f32 %v674, 0.0
    %v683 = vmax.f32 %v675, 0.0
    %v684 = vpack.c.bf16 %v676, %v676
    %v685 = vpack.c.bf16 %v677, %v677
    %v686 = vpack.c.bf16 %v678, %v678
    %v687 = vpack.c.bf16 %v679, %v679
    %v688 = vpack.c.bf16 %v680, %v680
    %v689 = vpack.c.bf16 %v681, %v681
    %v690 = vpack.c.bf16 %v682, %v682
    %v691 = vpack.c.bf16 %v683, %v683
    %v692 = vld [vmem:[%s5] sm:$0xff]
    %v693 = vld [vmem:[%s5 + $0x8] sm:$0xff]
    %v694 = vld [vmem:[%s5 + $0x10] sm:$0xff]
    %v695 = vld [vmem:[%s5 + $0x18] sm:$0xff]
    %v696 = vld [vmem:[%s5 + $0x20] sm:$0xff]
    %v697 = vld [vmem:[%s5 + $0x28] sm:$0xff]
    %v698 = vld [vmem:[%s5 + $0x30] sm:$0xff]
    %v699 = vld [vmem:[%s5 + $0x38] sm:$0xff]
    %v700 = vunpack.c.l.bf16 %v684
    %v701 = vunpack.c.l.bf16 %v685
    %v702 = vunpack.c.l.bf16 %v686
    %v703 = vunpack.c.l.bf16 %v687
    %v704 = vunpack.c.l.bf16 %v688
    %v705 = vunpack.c.l.bf16 %v689
    %v706 = vunpack.c.l.bf16 %v690
    %v707 = vunpack.c.l.bf16 %v691
    %709 = vset.pattern.permute.xlu0 0
    %710 = vperm.xlu0 %709, %v692
    %v711 = vpop.permute.xlu0 %710
    %714 = vset.pattern.permute.xlu0 0
    %715 = vperm.xlu0 %714, %v693
    %v716 = vpop.permute.xlu0 %715
    %719 = vset.pattern.permute.xlu0 0
    %720 = vperm.xlu0 %719, %v694
    %v721 = vpop.permute.xlu0 %720
    %724 = vset.pattern.permute.xlu0 0
    %725 = vperm.xlu0 %724, %v695
    %v726 = vpop.permute.xlu0 %725
    %729 = vset.pattern.permute.xlu0 0
    %730 = vperm.xlu0 %729, %v696
    %v731 = vpop.permute.xlu0 %730
    %734 = vset.pattern.permute.xlu0 0
    %735 = vperm.xlu0 %734, %v697
    %v736 = vpop.permute.xlu0 %735
    %739 = vset.pattern.permute.xlu0 0
    %740 = vperm.xlu0 %739, %v698
    %v741 = vpop.permute.xlu0 %740
    %744 = vset.pattern.permute.xlu0 0
    %745 = vperm.xlu0 %744, %v699
    %v746 = vpop.permute.xlu0 %745
    %v748 = vmul.f32 %v700, %v711
    %v749 = vmul.f32 %v701, %v716
    %v750 = vmul.f32 %v702, %v721
    %v751 = vmul.f32 %v703, %v726
    %v752 = vmul.f32 %v704, %v731
    %v753 = vmul.f32 %v705, %v736
    %v754 = vmul.f32 %v706, %v741
    %v755 = vmul.f32 %v707, %v746
    %v756 = vadd.f32 %v748, %v749
    %v757 = vadd.f32 %v756, %v750
    %v758 = vadd.f32 %v757, %v751
    %v759 = vadd.f32 %v758, %v752
    %v760 = vadd.f32 %v759, %v753
    %v761 = vadd.f32 %v760, %v754
    %v762 = vadd.f32 %v761, %v755
    %v763 = vrot.slane %v762, 4
    %v764 = vadd.f32 %v762, %v763
    %v765 = vrot.slane %v764, 2
    %v766 = vadd.f32 %v764, %v765
    %v767 = vrot.slane %v766, 1
    %v768 = vadd.f32 %v766, %v767
    %v769 = vld [vmem:[#allocation2] sm:$0x1]
    %771 = vset.pattern.permute.xlu0 0
    %772 = vperm.xlu0 %771, %v769
    %v773 = vpop.permute.xlu0 %772
    %v775 = vperm.slane %v773, 0
    %v776 = vadd.f32 %v768, %v775
    %777 = vst [vmem:[#allocation3] sm:$0x1] %v776
    // Predicated region
    $region30: #{critic_forward.1} parent=1 // pred_check
      _
    $region31: #{critic_forward.1} parent=1 // pred_check_branch
      %779 = sbr.rel (0) target = $region33
    $region32: #{critic_forward.1} parent=1 // pred_region
      %781 = vsyncadd [#allocation4], 0
      %s783 = sshll.u32 [#allocation3], 4
      %s784 = int_to_ptr.vmem [resolvable:$true] %s783
      %s785 = sshll.u32 %s7, 4
      %s786 = int_to_ptr.hbm [resolvable:$true] %s785
      %788 = dma.vmem_to_hbm [thread:$0]  %s784, 16, %s786, [#allocation4]
    $region33: #{critic_forward.1} parent=1 // pred_fallthru
      _
    // Predicated region
    $region34: #{critic_forward.1} parent=1 // pred_check
      _
    $region35: #{critic_forward.1} parent=1 // pred_check_branch
      %790 = sbr.rel (0) target = $region37
    $region36: #{critic_forward.1} parent=1 // pred_region
      %792 = dma.done [#allocation4], 16
    $region37: #{critic_forward.1} parent=1 // pred_fallthru
      _
    %793 = vsyncpa [#allocation4], 1

</llo_original>
